<compile_context>
chip_gen: v7x
topology: tpu7x:2x2x1
jax: 0.10.0
libtpu: 0.0.40
codegen_flags: <defaults>
</compile_context>

<pallas_src>
import functools
import math

import jax
import jax.numpy as jnp
from jax import lax
from jax.experimental import pallas as pl
from jax.experimental.pallas import tpu as pltpu

KERNEL_SET = (2, 3, 6, 7)
K_MAX = max(KERNEL_SET)

_TILE_M_DEFAULT = 512  # rows of M = B*N per grid step; sweep after layout fix


# --------------------------------------------------------------------------- #
# Kernel
# --------------------------------------------------------------------------- #
def _dilated_inception_kernel(x_ref, w_ref, b_ref, o_ref, *,
                              n_groups, g_cin, win_cin, g_cout):
    """One M-tile of the fused dilated-inception conv.

    x_ref: (tile_m, T_pad*Cin) bf16  -- lane-dense channels-last input slab
    w_ref: (win*Cin, G*Cout)   bf16  -- banded (time-windowed) fused weights
    b_ref: (1, G*Cout)         f32   -- bias replicated per output timestep
    o_ref: (tile_m, t_out_pad*Cout)  -- lane-dense output slab
    """
    w = w_ref[...]
    b = b_ref[...]
    # Static unroll over output-time groups: all slice offsets are compile-time
    # constants (no dynamic lane indexing); each group is one wide MXU matmul
    # that directly produces a 128-aligned output stripe.
    # TODO(synk): for very long sequences (n_groups >> 16) move the group loop
    # onto a second grid axis so it is pipelined instead of unrolled.
    for g in range(n_groups):
        x_win = x_ref[:, g * g_cin: g * g_cin + win_cin]
        acc = jnp.dot(x_win, w, preferred_element_type=jnp.float32)
        acc = acc + b                       # bias add in f32 (v5e-safe)
        o_ref[:, g * g_cout:(g + 1) * g_cout] = acc.astype(o_ref.dtype)


# --------------------------------------------------------------------------- #
# Wrapper helpers
# --------------------------------------------------------------------------- #
def _pack_fused_weights(weights, biases):
    """Left-zero-pad each branch to K_MAX taps; concat branches along Cout.

    Branch with kernel k, truncated to the last T_out steps, equals a 7-tap conv
    whose first (7-k) taps are zero -- so the fused conv reproduces the module.
    """
    cout_per, cin = weights[0].shape[0], weights[0].shape[1]
    cout = cout_per * len(KERNEL_SET)
    w_packed = jnp.zeros((K_MAX, cin, cout), jnp.float32)
    b_packed = jnp.zeros((1, cout), jnp.float32)
    for i, k in enumerate(KERNEL_SET):
        wk_t = jnp.transpose(weights[i][:, :, 0, :], (2, 1, 0))   # (k, cin, cout_per)
        w_packed = w_packed.at[K_MAX - k:, :, i * cout_per:(i + 1) * cout_per].set(wk_t)
        b_packed = b_packed.at[0, i * cout_per:(i + 1) * cout_per].set(biases[i])
    return w_packed, b_packed


def _make_banded_weight(w_packed, dilation, group):
    """(K_MAX, Cin, Cout) -> ((group + 6d)*Cin, group*Cout) banded matrix.

    W_band[s*Cin + c, r*Cout + co] = Wp[j, c, co] iff s == r + j*dilation,
    so one matmul of an input window (rows, win*Cin) emits `group` output
    timesteps already laid out lane-dense in (t, cout) order.
    """
    k_max, cin, cout = w_packed.shape
    win = group + (k_max - 1) * dilation
    s_idx = jnp.arange(win)[:, None]
    r_idx = jnp.arange(group)[None, :]
    w4 = jnp.zeros((win, group, cin, cout), jnp.float32)
    for j in range(k_max):
        mask = (s_idx == r_idx + j * dilation).astype(jnp.float32)   # (win, group)
        w4 = w4 + mask[:, :, None, None] * w_packed[j][None, None, :, :]
    w_band = jnp.transpose(w4, (0, 2, 1, 3)).reshape(win * cin, group * cout)
    return w_band, win


def _choose_group(cout, lane_multiple):
    """Smallest G with (G*Cout) % lane_multiple == 0, floored for band amortization."""
    g = lane_multiple // math.gcd(cout, lane_multiple)
    while g < 4:            # keep the (K_MAX-1)*d band overlap amortized
        g *= 2
    return g


def _pick_tile_m(m, tile_m_req):
    if m <= 8:
        return m
    tile = min(tile_m_req, m)
    if tile >= m and m >= 16:
        tile = m // 2       # guarantee >=2 grid steps so v7x's 2 TCs both work
    return max(8, (tile // 8) * 8)


# --------------------------------------------------------------------------- #
# Forward
# --------------------------------------------------------------------------- #
def dilated_inception_channels_last(x_mtc, weights, biases, dilation_factor=2, *,
                                    tile_m=_TILE_M_DEFAULT, lane_multiple=128,
                                    out_dtype=jnp.bfloat16):
    """Channels-last core: x_mtc (M, T, Cin) -> (M, T_out, Cout)."""
    m, T, cin = x_mtc.shape
    t_out = T - dilation_factor * (K_MAX - 1)
    assert t_out > 0, "sequence too short for largest dilated kernel"
    cout_per = weights[0].shape[0]
    cout = cout_per * len(KERNEL_SET)

    # Group G output timesteps per matmul so the matmul N-dim / output stripe is a
    # multiple of 128 lanes (set lane_multiple=256 to sweep wider N on v6e/v7x).
    G = _choose_group(cout, lane_multiple)
    n_groups = -(-t_out // G)
    t_out_pad = n_groups * G
    t_pad = t_out_pad + dilation_factor * (K_MAX - 1)

    w_packed, b_packed = _pack_fused_weights(weights, biases)
    w_band, win = _make_banded_weight(w_packed, dilation_factor, G)
    w_band = w_band.astype(jnp.bfloat16)
    b_band = jnp.tile(b_packed, (1, G))                           # (1, G*Cout) f32

    # Lane-dense streamed input: (M, T_pad*Cin) bf16 (free row-major reshape).
    x = x_mtc.astype(jnp.bfloat16)
    if t_pad > T:
        x = jnp.pad(x, ((0, 0), (0, t_pad - T), (0, 0)))          # pad only feeds
    x2d = x.reshape(m, t_pad * cin)                               # discarded outputs

    tile = _pick_tile_m(m, tile_m)
    grid = (pl.cdiv(m, tile),)

    # VMEM budget from the actual double-buffered block sizes plus headroom for
    # the f32 accumulator / window temporaries; clamp to v7x's 64 MiB physical.
    out_isz = jnp.dtype(out_dtype).itemsize
    vmem_est = (2 * tile * t_pad * cin * 2                         # input blocks
                + 2 * tile * t_out_pad * cout * out_isz            # output blocks
                + 2 * (win * cin * G * cout * 2 + G * cout * 4)    # weights + bias
                + 2 * (tile * G * cout * 4 + tile * win * cin * 2))  # temporaries
    vmem_limit = int(min(max(vmem_est * 5 // 4, 16 * 1024 * 1024), 64 * 1024 * 1024))

    out2d = pl.pallas_call(
        functools.partial(_dilated_inception_kernel, n_groups=n_groups,
                          g_cin=G * cin, win_cin=win * cin, g_cout=G * cout),
        out_shape=jax.ShapeDtypeStruct((m, t_out_pad * cout), out_dtype),
        grid=grid,
        in_specs=[
            pl.BlockSpec((tile, t_pad * cin), lambda i: (i, 0)),       # streamed M
            pl.BlockSpec((win * cin, G * cout), lambda i: (0, 0)),     # resident W
            pl.BlockSpec((1, G * cout), lambda i: (0, 0)),             # resident b
        ],
        out_specs=pl.BlockSpec((tile, t_out_pad * cout), lambda i: (i, 0)),
        compiler_params=pltpu.CompilerParams(
            dimension_semantics=("parallel",),
            vmem_limit_bytes=vmem_limit),
    )(x2d, w_band, b_band)

    # Drop the padded output timesteps (they never read valid data anyway).
    return out2d.reshape(m, t_out_pad, cout)[:, :t_out, :]


def dilated_inception_forward(x_nchw, weights, biases, dilation_factor=2, **kw):
    """PyTorch-layout entry: (B, Cin, N, T) -> (B, Cout, N, T_out).

    weights[i]: (Cout/4, Cin, 1, k_i).  biases[i]: (Cout/4,).
    """
    B, cin, n_nodes, T = x_nchw.shape
    # TODO(synk): keep model activations channels-last (M, T, C) end-to-end so the
    # two full-tensor HBM relayouts around the kernel (this transpose and the one
    # below) disappear for memory-bound deployments.
    x_mtc = jnp.transpose(x_nchw, (0, 2, 3, 1)).reshape(B * n_nodes, T, cin)
    out = dilated_inception_channels_last(x_mtc, weights, biases, dilation_factor, **kw)
    t_out, cout = out.shape[1], out.shape[2]
    out = out.reshape(B, n_nodes, t_out, cout)
    return jnp.transpose(out, (0, 3, 1, 2))


# --------------------------------------------------------------------------- #
# Pure-JAX reference (matches the PyTorch module) for verification
# --------------------------------------------------------------------------- #
def _reference_forward(x_nchw, weights, biases, dilation_factor=2):
    outs = []
    for i, k in enumerate(KERNEL_SET):
        o = lax.conv_general_dilated(
            x_nchw, weights[i],
            window_strides=(1, 1), padding='VALID',
            rhs_dilation=(1, dilation_factor),
            dimension_numbers=('NCHW', 'OIHW', 'NCHW'))
        o = o + biases[i][None, :, None, None]
        outs.append(o)
    t_out = outs[-1].shape[3]
    outs = [o[..., -t_out:] for o in outs]
    return jnp.concatenate(outs, axis=1)


if __name__ == "__main__":
    # Small shapes consistent with the module: B=2, Cin=4, Cout=8, N=16 nodes, T=16.
    B, cin, cout, n_nodes, T = 2, 4, 8, 16, 16
    dilation_factor = 2
    cout_per = cout // len(KERNEL_SET)

    key = jax.random.PRNGKey(0)
    key, kx = jax.random.split(key)
    x = jax.random.normal(kx, (B, cin, n_nodes, T), dtype=jnp.float32)

    weights, biases = [], []
    for k in KERNEL_SET:
        key, kw, kb = jax.random.split(key, 3)
        weights.append(0.1 * jax.random.normal(kw, (cout_per, cin, 1, k), dtype=jnp.float32))
        biases.append(0.1 * jax.random.normal(kb, (cout_per,), dtype=jnp.float32))

    out = dilated_inception_forward(x, weights, biases, dilation_factor)
    out = jax.block_until_ready(out)
    out_f32 = out.astype(jnp.float32)

    # Semantic check vs the f32 conv reference (loose: bf16 operands + bf16 output).
    ref = _reference_forward(x, weights, biases, dilation_factor)
    assert out.shape == ref.shape, (out.shape, ref.shape)
    assert jnp.allclose(out_f32, ref, atol=5e-2, rtol=5e-2), "mismatch vs f32 reference conv"

    # Tighter check: same conv on bf16-quantized inputs/weights (f32 math) must match
    # to roughly one bf16 output ulp.
    xq = x.astype(jnp.bfloat16).astype(jnp.float32)
    wq = [w.astype(jnp.bfloat16).astype(jnp.float32) for w in weights]
    ref_q = _reference_forward(xq, wq, biases, dilation_factor)
    assert jnp.allclose(out_f32, ref_q, atol=1e-2, rtol=1e-2), "mismatch vs bf16-quantized reference"

    print("KERNEL_OK")
</pallas_src>

<mosaic_0001>
module attributes {stable_mosaic.version = 11 : i64} {
  func.func @_dilated_inception_kernel(%arg0: i32, %arg1: memref<16x112xbf16, #tpu.memory_space<vmem>>, %arg2: memref<112x128xbf16, #tpu.memory_space<vmem>>, %arg3: memref<1x128xf32, #tpu.memory_space<vmem>>, %arg4: memref<16x128xbf16, #tpu.memory_space<vmem>>) attributes {dimension_semantics = [#tpu.dimension_semantics<parallel>], iteration_bounds = array<i64: 2>, scalar_prefetch = 0 : i64, scratch_operands = 0 : i64, tpu.core_type = #tpu.core_type<tc>, window_params = [{transform_indices = @transform_0, window_bounds = array<i64: 16, 112>}, {pipeline_mode = #tpu.pipeline_mode<synchronous>, transform_indices = @transform_1, window_bounds = array<i64: 112, 128>}, {pipeline_mode = #tpu.pipeline_mode<synchronous>, transform_indices = @transform_2, window_bounds = array<i64: 1, 128>}, {transform_indices = @transform_3, window_bounds = array<i64: 16, 128>}]} {
    %c0 = arith.constant 0 : index
    %c0_0 = arith.constant 0 : index
    %0 = vector.load %arg2[%c0, %c0_0] : memref<112x128xbf16, #tpu.memory_space<vmem>>, vector<112x128xbf16>
    %c0_1 = arith.constant 0 : index
    %c0_2 = arith.constant 0 : index
    %1 = vector.load %arg3[%c0_1, %c0_2] : memref<1x128xf32, #tpu.memory_space<vmem>>, vector<1x128xf32>
    %c0_3 = arith.constant 0 : index
    %c0_4 = arith.constant 0 : index
    %2 = vector.load %arg1[%c0_3, %c0_4] : memref<16x112xbf16, #tpu.memory_space<vmem>>, vector<16x112xbf16>
    %cst = arith.constant dense<0.000000e+00> : vector<16x128xf32>
    %3 = tpu.matmul %2, %0, %cst {dimension_numbers = #tpu.dot_dimension_numbers<[1], [0], [0], [1], [0, 0, 1, 1], [], []>} : vector<16x112xbf16>, vector<112x128xbf16>, vector<16x128xf32> -> vector<16x128xf32>
    %4 = vector.broadcast %1 : vector<1x128xf32> to vector<16x128xf32>
    %5 = arith.addf %3, %4 : vector<16x128xf32>
    %6 = arith.truncf %5 : vector<16x128xf32> to vector<16x128xbf16>
    %c0_5 = arith.constant 0 : index
    %c0_6 = arith.constant 0 : index
    %7 = vector.load %arg4[%c0_5, %c0_6] : memref<16x128xbf16, #tpu.memory_space<vmem>>, vector<16x128xbf16>
    tpu.vector_store %arg4[%c0_5, %c0_6], %6 {strides = array<i32>} : memref<16x128xbf16, #tpu.memory_space<vmem>>, vector<16x128xbf16>,
    return
  }
  func.func @transform_0(%arg0: i32) -> (i32, i32) {
    %c0_i32 = arith.constant 0 : i32
    %c0_i32_0 = arith.constant 0 : i32
    return %arg0, %c0_i32 : i32, i32
  }
  func.func @transform_1(%arg0: i32) -> (i32, i32) {
    %c0_i32 = arith.constant 0 : i32
    %c0_i32_0 = arith.constant 0 : i32
    %c0_i32_1 = arith.constant 0 : i32
    return %c0_i32, %c0_i32_0 : i32, i32
  }
  func.func @transform_2(%arg0: i32) -> (i32, i32) {
    %c0_i32 = arith.constant 0 : i32
    %c0_i32_0 = arith.constant 0 : i32
    %c0_i32_1 = arith.constant 0 : i32
    return %c0_i32, %c0_i32_0 : i32, i32
  }
  func.func @transform_3(%arg0: i32) -> (i32, i32) {
    %c0_i32 = arith.constant 0 : i32
    %c0_i32_0 = arith.constant 0 : i32
    return %arg0, %c0_i32 : i32, i32
  }
}

</mosaic_0001>

<llo_original>
// kernel: tpu_custom_call.1
$region0: #{tpu_custom_call.1}
  #allocation0 [shape = 'u32[]', space=smem, size = 0x4, offset = 0x4, fixed_abs, tag = 'smem constant byte address 0x4 - core index']
  #allocation1 [shape = 'u32[144,128]{1,0:T(1,128)}', space=vmem, size = 0x12000, scoped, tag = 'internal scratch']
  %s0 = inlined_call_operand.hbm [shape: bf16[32,112], index: 0, kind: input, shape index: {}]
  %s1 = inlined_call_operand.hbm [shape: bf16[112,128], index: 1, kind: input, shape index: {}]
  %s2 = inlined_call_operand.vmem [shape: f32[1,128], index: 2, kind: input, shape index: {}]
  %s3 = inlined_call_operand.hbm [shape: bf16[32,128], index: 3, kind: output, shape index: {}]
  %s4 = sld [smem:[#allocation0]]
  $region53: #{tpu_custom_call.1} parent=0
    _
  %s6 = ssub.s32 1, %s4
  %s7 = scalar_select 0, %s6, %s4
  $region1: #{tpu_custom_call.1} parent=0
    #allocation2 [shape = 'u8[8192]{0}', space=vmem, size = 0x2000, scoped, tag = 'input window, operand 0']
    #allocation3 [shape = 's32[2]{0}', space=sflag, size = 0x8, scoped, tag = 'scoped memory for tpu_custom_call.1']
    #allocation4 [shape = 's32[2]{0}', space=sflag, size = 0x8, scoped, tag = 'scoped memory for tpu_custom_call.1']
    #allocation5 [shape = 'u8[28672]{0}', space=vmem, size = 0x7000, scoped, tag = 'input window, operand 1, single buffered']
    #allocation6 [shape = 's32[1]{0}', space=sflag, size = 0x4, scoped, tag = 'scoped memory for tpu_custom_call.1']
    #allocation7 [shape = 'u8[8192]{0}', space=vmem, size = 0x2000, scoped, tag = 'output window, operand 0']
    %8 = vsyncpa [#allocation3], 0
    %s9 = scalar_lea.sflag [#allocation3], 1
    %10 = vsyncpa %s9, 0
    %11 = vsyncpa [#allocation6], 0
    %12 = vsyncpa [#allocation4], 0
    %s13 = scalar_lea.sflag [#allocation4], 1
    %14 = vsyncpa %s13, 0
    loop: start=0, step=1, limit=4
    $region2: #{tpu_custom_call.1} parent=1 // loop_pre_header
      _
    $region3: #{tpu_custom_call.1} parent=1 // loop_header
      %s16 = sphi 0, %s20
      %p17 = scmp.ge.s32.totalorder %s16, 4
      %s26 = sphi 0, %s28
      %s29 = sphi 0, %s26
      %s30 = sphi 0, %s29
      %s46 = sphi 0, %s30
      %s50 = sphi 0, %s50
      %s52 = sphi 0, %s50
      %s53 = sphi 0, %s52
      %s67 = sphi 0, %s53
      %s71 = sphi 0, %s71
      %s73 = sphi 0, %s71
      %s74 = sphi 0, %s73
      %s88 = sphi 0, %s74
      %s94 = sphi 0, %s96
      %s97 = sphi 0, %s94
      %s98 = sphi 0, %s97
      %s114 = sphi 0, %s98
    $region4: #{tpu_custom_call.1} parent=1 // loop_header_branch
      %19 = sbr.rel (%p17) target = $region8
    $region5: #{tpu_custom_call.1} parent=1 // loop_body
      %s21 = ssub.s32 %s16, 1
      %s22 = ssub.s32 %s16, 2
      %s23 = sadd.s32 %s16, 1
      %s24 = ssub.s32 %s16, %s23
      %p25 = scmp.eq.s32.totalorder %s24, 0
      %s27 = sadd.s32 %s26, 1
      %s28 = scalar_select %p25, %s26, %s27
      %p31 = pneg %p25
      %p32 = scmp.eq.s32.totalorder %s16, 1
      %p33 = por %p31, %p32
      %p34 = scmp.ne.s32.totalorder %s26, %s29
      %p35 = scmp.eq.s32.totalorder %s16, 0
      %p36 = por %p34, %p35
      %p37 = scmp.ne.s32.totalorder %s26, %s29
      %p38 = scmp.eq.s32.totalorder %s21, 1
      %p39 = por %p37, %p38
      %p40 = scmp.ne.s32.totalorder %s29, %s30
      %p41 = scmp.eq.s32.totalorder %s21, 0
      %p42 = por %p40, %p41
      %p43 = scmp.ne.s32.totalorder %s29, %s30
      %p44 = scmp.eq.s32.totalorder %s22, 1
      %p45 = por %p43, %p44
      %p47 = scmp.ne.s32.totalorder %s30, %s46
      %p48 = scmp.eq.s32.totalorder %s22, 0
      %p49 = por %p47, %p48
      %s51 = sadd.s32 %s50, 1
      %p54 = scmp.eq.s32.totalorder %s16, 1
      %p55 = scmp.ne.s32.totalorder %s50, %s52
      %p56 = scmp.eq.s32.totalorder %s16, 0
      %p57 = por %p55, %p56
      %p58 = scmp.ne.s32.totalorder %s50, %s52
      %p59 = scmp.eq.s32.totalorder %s21, 1
      %p60 = por %p58, %p59
      %p61 = scmp.ne.s32.totalorder %s52, %s53
      %p62 = scmp.eq.s32.totalorder %s21, 0
      %p63 = por %p61, %p62
      %p64 = scmp.ne.s32.totalorder %s52, %s53
      %p65 = scmp.eq.s32.totalorder %s22, 1
      %p66 = por %p64, %p65
      %p68 = scmp.ne.s32.totalorder %s53, %s67
      %p69 = scmp.eq.s32.totalorder %s22, 0
      %p70 = por %p68, %p69
      %s72 = sadd.s32 %s71, 1
      %p75 = scmp.eq.s32.totalorder %s16, 1
      %p76 = scmp.ne.s32.totalorder %s71, %s73
      %p77 = scmp.eq.s32.totalorder %s16, 0
      %p78 = por %p76, %p77
      %p79 = scmp.ne.s32.totalorder %s71, %s73
      %p80 = scmp.eq.s32.totalorder %s21, 1
      %p81 = por %p79, %p80
      %p82 = scmp.ne.s32.totalorder %s73, %s74
      %p83 = scmp.eq.s32.totalorder %s21, 0
      %p84 = por %p82, %p83
      %p85 = scmp.ne.s32.totalorder %s73, %s74
      %p86 = scmp.eq.s32.totalorder %s22, 1
      %p87 = por %p85, %p86
      %p89 = scmp.ne.s32.totalorder %s74, %s88
      %p90 = scmp.eq.s32.totalorder %s22, 0
      %p91 = por %p89, %p90
      %s92 = ssub.s32 %s16, %s23
      %p93 = scmp.eq.s32.totalorder %s92, 0
      %s95 = sadd.s32 %s94, 1
      %s96 = scalar_select %p93, %s94, %s95
      %p99 = pneg %p93
      %p100 = scmp.eq.s32.totalorder %s16, 1
      %p101 = por %p99, %p100
      %p102 = scmp.ne.s32.totalorder %s94, %s97
      %p103 = scmp.eq.s32.totalorder %s16, 0
      %p104 = por %p102, %p103
      %p105 = scmp.ne.s32.totalorder %s94, %s97
      %p106 = scmp.eq.s32.totalorder %s21, 1
      %p107 = por %p105, %p106
      %p108 = scmp.ne.s32.totalorder %s97, %s98
      %p109 = scmp.eq.s32.totalorder %s21, 0
      %p110 = por %p108, %p109
      %p111 = scmp.ne.s32.totalorder %s97, %s98
      %p112 = scmp.eq.s32.totalorder %s22, 1
      %p113 = por %p111, %p112
      %p115 = scmp.ne.s32.totalorder %s98, %s114
      %p116 = scmp.eq.s32.totalorder %s22, 0
      %p117 = por %p115, %p116
      %p118 = scmp.le.s32.totalorder 1, %s16
      %p119 = scmp.lt.s32.totalorder %s16, 3
      %p120 = pnand %p118, %p119
      %p121 = pneg %p120
      // Predicated region
      $region9: #{tpu_custom_call.1} parent=5 // pred_check
        _
      $region10: #{tpu_custom_call.1} parent=5 // pred_check_branch
        %123 = sbr.rel (%p120) target = $region12
      $region11: #{tpu_custom_call.1} parent=5 // pred_region
        %s124 = ssub.s32 %s16, 1
        // Predicated region
        $region13: #{tpu_custom_call.1} parent=11 // pred_check
          %p125 = pneg %p63
        $region14: #{tpu_custom_call.1} parent=11 // pred_check_branch
          %127 = sbr.rel (%p125) target = $region16
        $region15: #{tpu_custom_call.1} parent=11 // pred_region
          %s129 = ssub.s32 896, 896
          %130 = vsyncadd [#allocation6], %s129
          %s131 = sshll.u32 [#allocation5], 4
          %s132 = int_to_ptr.vmem [resolvable:$true] %s131
          %137 = dma.hbm_to_vmem [thread:$0]  %s1, 896, %s132, [#allocation6], 64, 64, 4
        $region16: #{tpu_custom_call.1} parent=11 // pred_fallthru
          _
        // Predicated region
        $region17: #{tpu_custom_call.1} parent=11 // pred_check
          %p138 = pneg %p84
        $region18: #{tpu_custom_call.1} parent=11 // pred_check_branch
          %140 = sbr.rel (%p138) target = $region20
        $region19: #{tpu_custom_call.1} parent=11 // pred_region
          _
        $region20: #{tpu_custom_call.1} parent=11 // pred_fallthru
          _
      $region12: #{tpu_custom_call.1} parent=5 // pred_fallthru
        _
      %p141 = scmp.lt.s32.totalorder %s16, 2
      // Predicated region
      $region21: #{tpu_custom_call.1} parent=5 // pred_check
        %p142 = pneg %p141
      $region22: #{tpu_custom_call.1} parent=5 // pred_check_branch
        %144 = sbr.rel (%p142) target = $region24
      $region23: #{tpu_custom_call.1} parent=5 // pred_region
        // Predicated region
        $region25: #{tpu_custom_call.1} parent=23 // pred_check
          %p145 = pneg %p36
        $region26: #{tpu_custom_call.1} parent=23 // pred_check_branch
          %147 = sbr.rel (%p145) target = $region28
        $region27: #{tpu_custom_call.1} parent=23 // pred_region
          %s148 = sand.u32 %s26, 1
          %s149 = scalar_lea.sflag [#allocation3], %s148
          %s150 = sand.u32 %s26, 1
          %s151 = smul.addr %s150, 8
          %s152 = scalar_lea.vmem [#allocation2], %s151
          %s153 = smul.u32 2, %s16
          %s155 = ssub.s32 128, 128
          %156 = vsyncadd %s149, %s155
          %s157 = smul.addr %s153, 64
          %s158 = scalar_lea.hbm %s0, %s157
          %s159 = sshll.u32 %s152, 4
          %s160 = int_to_ptr.vmem [resolvable:$true] %s159
          %165 = dma.hbm_to_vmem [thread:$0]  %s158, 128, %s160, %s149, 64, 64, 4
        $region28: #{tpu_custom_call.1} parent=23 // pred_fallthru
          _
      $region24: #{tpu_custom_call.1} parent=5 // pred_fallthru
        _
      %p166 = scmp.le.s32.totalorder 1, %s16
      %p167 = scmp.lt.s32.totalorder %s16, 3
      %p168 = pnand %p166, %p167
      %p169 = pneg %p168
      // Predicated region
      $region29: #{tpu_custom_call.1} parent=5 // pred_check
        _
      $region30: #{tpu_custom_call.1} parent=5 // pred_check_branch
        %171 = sbr.rel (%p168) target = $region32
      $region31: #{tpu_custom_call.1} parent=5 // pred_region
        %s172 = ssub.s32 %s16, 1
        %s173 = sand.u32 %s29, 1
        %s174 = scalar_lea.sflag [#allocation3], %s173
        %s175 = sand.u32 %s29, 1
        %s176 = smul.addr %s175, 8
        %s177 = scalar_lea.vmem [#allocation2], %s176
        // Predicated region
        $region33: #{tpu_custom_call.1} parent=31 // pred_check
          %p178 = pneg %p42
        $region34: #{tpu_custom_call.1} parent=31 // pred_check_branch
          %180 = sbr.rel (%p178) target = $region36
        $region35: #{tpu_custom_call.1} parent=31 // pred_region
          %181 = dma.done %s174, 128
        $region36: #{tpu_custom_call.1} parent=31 // pred_fallthru
          _
        // Predicated region
        $region37: #{tpu_custom_call.1} parent=31 // pred_check
          %p182 = pneg %p63
        $region38: #{tpu_custom_call.1} parent=31 // pred_check_branch
          %184 = sbr.rel (%p182) target = $region40
        $region39: #{tpu_custom_call.1} parent=31 // pred_region
          %185 = dma.done [#allocation6], 896
        $region40: #{tpu_custom_call.1} parent=31 // pred_fallthru
          _
        %s186 = sand.u32 %s29, 1
        %s187 = scalar_lea.sflag [#allocation3], %s186
        %s188 = sand.u32 %s29, 1
        %s189 = smul.addr %s188, 8
        %s190 = scalar_lea.vmem [#allocation2], %s189
        %p191 = pneg %p42
        %p192 = pneg %p39
        %p193 = pneg %p63
        %p194 = pneg %p60
        %p195 = pneg %p84
        %p196 = pneg %p81
        %p197 = pneg %p110
        %p198 = pneg %p107
        %s199 = sand.u32 %s97, 1
        %s200 = scalar_lea.sflag [#allocation4], %s199
        %s201 = sand.u32 %s97, 1
        %s202 = smul.addr %s201, 8
        %s203 = scalar_lea.vmem [#allocation7], %s202
        %s204 = smul.u32 2, %s21
        %s205 = smul.u32 2, %s21
        %v207 = vld [vmem:[#allocation5] sm:$0xf]
        %v208 = vld [vmem:[#allocation5 + $0x4] sm:$0xf]
        %v209 = vld [vmem:[#allocation5 + $0x8] sm:$0xf]
        %v210 = vld [vmem:[#allocation5 + $0xc] sm:$0xf]
        %v211 = vld [vmem:[#allocation5 + $0x10] sm:$0xf]
        %v212 = vld [vmem:[#allocation5 + $0x14] sm:$0xf]
        %v213 = vld [vmem:[#allocation5 + $0x18] sm:$0xf]
        %v214 = vld [vmem:[#allocation5 + $0x1c] sm:$0xf]
        %v215 = vld [vmem:[#allocation5 + $0x20] sm:$0xf]
        %v216 = vld [vmem:[#allocation5 + $0x24] sm:$0xf]
        %v217 = vld [vmem:[#allocation5 + $0x28] sm:$0xf]
        %v218 = vld [vmem:[#allocation5 + $0x2c] sm:$0xf]
        %v219 = vld [vmem:[#allocation5 + $0x30] sm:$0xf]
        %v220 = vld [vmem:[#allocation5 + $0x34] sm:$0xf]
        %v221 = vld [vmem:[%s2] sm:$0x1]
        %v222 = vld [vmem:[%s177] sm:$0xf]
        %v223 = vld [vmem:[%s177 + $0x4] sm:$0xf]
        %v225 = vlaneseq
        %v226 = vshrl.u32 %v225, 7
        %v227 = vsub.s32 0, %v226
        %v228 = vrot.slane %v221, %v227
        %v232 = vunpack.c.l.b16 %v222
        %v233 = vunpack.c.l.b16 %v223
        %v234 = vpack.c.b16 %v233, %v232
        %v249 = vunpack.c.l.b16 %v207
        %v250 = vunpack.c.l.b16 %v208
        %v251 = vunpack.c.l.b16 %v209
        %v252 = vunpack.c.l.b16 %v210
        %v253 = vunpack.c.l.b16 %v211
        %v254 = vunpack.c.l.b16 %v212
        %v255 = vunpack.c.l.b16 %v213
        %v256 = vunpack.c.l.b16 %v214
        %v257 = vunpack.c.l.b16 %v215
        %v258 = vunpack.c.l.b16 %v216
        %v259 = vunpack.c.l.b16 %v217
        %v260 = vunpack.c.l.b16 %v218
        %v261 = vunpack.c.l.b16 %v219
        %v262 = vunpack.c.l.b16 %v220
        %v263 = vpack.c.b16 %v250, %v249
        %v264 = vpack.c.b16 %v252, %v251
        %v265 = vpack.c.b16 %v254, %v253
        %v266 = vpack.c.b16 %v256, %v255
        %v267 = vpack.c.b16 %v258, %v257
        %v268 = vpack.c.b16 %v260, %v259
        %v269 = vpack.c.b16 %v262, %v261
        %vm277 = vcmask 916480
        %v279 = vsel %vm277, %v234, 0
        %281 = vmatprep.subr.bf16.mxu0 0
        %282 = vmatpush1.bf16.msra.mxu0 %v263
        %283 = vmatprep.subr.bf16.mxu0 0
        %284 = vmatpush1.bf16.msra.mxu0 %v264
        %285 = vmatprep.subr.bf16.mxu0 0
        %286 = vmatpush1.bf16.msra.mxu0 %v265
        %287 = vmatprep.subr.bf16.mxu0 0
        %288 = vmatpush1.bf16.msra.mxu0 %v266
        %289 = vmatprep.subr.bf16.mxu0 0
        %290 = vmatpush1.bf16.msra.mxu0 %v267
        %291 = vmatprep.subr.bf16.mxu0 0
        %292 = vmatpush1.bf16.msra.mxu0 %v268
        %293 = vmatprep.subr.bf16.mxu0 0
        %294 = vmatpush1.bf16.msra.mxu0 %v269
        %295 = vmatprep.subr.bf16.mxu0 0
        %296 = vmatpush1.bf16.msra.mxu0 0
        %297 = vmatprep.subr.bf16.mxu0 0
        %298 = vmatpush1.bf16.msra.mxu0 0
        %299 = vmatprep.subr.bf16.mxu0 0
        %300 = vmatpush1.bf16.msra.mxu0 0
        %301 = vmatprep.subr.bf16.mxu0 0
        %302 = vmatpush1.bf16.msra.mxu0 0
        %303 = vmatprep.subr.bf16.mxu0 0
        %304 = vmatpush1.bf16.msra.mxu0 0
        %305 = vmatprep.subr.bf16.mxu0 0
        %306 = vmatpush1.bf16.msra.mxu0 0
        %307 = vmatprep.subr.bf16.mxu0 0
        %308 = vmatpush1.bf16.msra.mxu0 0
        %309 = vmatprep.subr.bf16.mxu0 0
        %310 = vmatpush1.bf16.msra.mxu0 0
        %311 = vmatprep.subr.bf16.mxu0 0
        %312 = vmatpush1.bf16.msra.mxu0 0
        %313 = vmatprep.mubr.bf16.mxu0 0
        %314 = vmatmul.mubr.bf16.gmra.mrb[0].mxu0 %v279
        %v315 = vpop.f32.mrb[0].mxu0
        %v316 = vadd.f32 %v228, %v315
        %v317 = vpop.f32.mrb[0].mxu0
        %v318 = vpop.f32.mrb[0].mxu0
        %v319 = vadd.f32 %v228, %v318
        %v320 = vpop.f32.mrb[0].mxu0
        %321 = vdwg.mxu0
        %v322 = vpack.c.bf16 %v319, %v316
        %v324 = vunpack.c.l.b16 %v322
        %v325 = vunpack.c.h.b16 %v322
        %v326 = vpack.c.b16 %v324, %v324
        %v327 = vpack.c.b16 %v325, %v325
        %330 = vst [vmem:[%s203] sm:$0xf] %v326
        %331 = vst [vmem:[%s203 + $0x4] sm:$0xf] %v327
        %s332 = sand.u32 %s97, 1
        %s333 = scalar_lea.sflag [#allocation4], %s332
        %s334 = sand.u32 %s97, 1
        %s335 = smul.addr %s334, 8
        %s336 = scalar_lea.vmem [#allocation7], %s335
        // Predicated region
        $region41: #{tpu_custom_call.1} parent=31 // pred_check
          %p337 = pneg %p107
        $region42: #{tpu_custom_call.1} parent=31 // pred_check_branch
          %339 = sbr.rel (%p337) target = $region44
        $region43: #{tpu_custom_call.1} parent=31 // pred_region
          %s340 = smul.u32 2, %s21
          %s342 = ssub.s32 128, 128
          %343 = vsyncadd %s333, %s342
          %s344 = smul.addr %s340, 64
          %s345 = scalar_lea.hbm %s3, %s344
          %s346 = sshll.u32 %s336, 4
          %s347 = int_to_ptr.vmem [resolvable:$true] %s346
          %352 = dma.vmem_to_hbm [thread:$0]  %s347, 128, %s345, %s333, 64, 64, 4
        $region44: #{tpu_custom_call.1} parent=31 // pred_fallthru
          _
      $region32: #{tpu_custom_call.1} parent=5 // pred_fallthru
        _
      %p353 = scmp.le.s32.totalorder 2, %s16
      // Predicated region
      $region45: #{tpu_custom_call.1} parent=5 // pred_check
        %p354 = pneg %p353
      $region46: #{tpu_custom_call.1} parent=5 // pred_check_branch
        %356 = sbr.rel (%p354) target = $region48
      $region47: #{tpu_custom_call.1} parent=5 // pred_region
        %s357 = ssub.s32 %s16, 2
        // Predicated region
        $region49: #{tpu_custom_call.1} parent=47 // pred_check
          %p358 = pneg %p113
        $region50: #{tpu_custom_call.1} parent=47 // pred_check_branch
          %360 = sbr.rel (%p358) target = $region52
        $region51: #{tpu_custom_call.1} parent=47 // pred_region
          %s361 = sand.u32 %s98, 1
          %s362 = scalar_lea.sflag [#allocation4], %s361
          %s363 = sand.u32 %s98, 1
          %s364 = smul.addr %s363, 8
          %s365 = scalar_lea.vmem [#allocation7], %s364
          %366 = dma.done %s362, 128
        $region52: #{tpu_custom_call.1} parent=47 // pred_fallthru
          _
      $region48: #{tpu_custom_call.1} parent=5 // pred_fallthru
        _
    $region6: #{tpu_custom_call.1} parent=1 // loop_footer
      %s20 = sadd.s32 1, %s16
    $region7: #{tpu_custom_call.1} parent=1 // loop_footer_branch
      %15 = sbr.rel target = $region3
    $region8: #{tpu_custom_call.1} parent=1 // loop_exit
      _
    %367 = vsyncpa [#allocation3], 1
    %s368 = scalar_lea.sflag [#allocation3], 1
    %369 = vsyncpa %s368, 1
    %370 = vsyncpa [#allocation6], 1
    %371 = vsyncpa [#allocation4], 1
    %s372 = scalar_lea.sflag [#allocation4], 1
    %373 = vsyncpa %s372, 1

</llo_original>
